<compile_context>
chip_gen: v6e
topology: v6e:2x2x1
jax: 0.10.0
libtpu: 0.0.40
codegen_flags: <defaults>
</compile_context>

<pallas_src>
import functools

import jax
import jax.numpy as jnp
from jax import lax
from jax.experimental import pallas as pl
from jax.experimental.pallas import tpu as pltpu


# ----------------------------------------------------------------------------
# GED activation (assumed parametric form, see TODO above)
# ----------------------------------------------------------------------------
def _ged_relu(x, l, k1, k2, p):
    # clamp the exp argument so the unselected branch stays finite
    neg = l * k2 * (jnp.exp(p * jnp.minimum(x, 0.0)) - 1.0)
    return jnp.where(x > 0, k1 * x, neg)


def _round_up(x, m):
    return (x + m - 1) // m * m


@functools.lru_cache(maxsize=None)
def _vmem_limit_bytes():
    # 75% of the chip's physical VMEM (v5e/v6e -> 96 MiB, v7x -> 48 MiB);
    # conservative 48 MiB fallback if the query is unavailable.
    try:
        cap = int(pltpu.get_tpu_info().vmem_capacity_bytes)
        return int(min(cap * 3 // 4, 96 * 1024 * 1024))
    except Exception:
        return 48 * 1024 * 1024


# ----------------------------------------------------------------------------
# Single-K-tile 1x1-conv matmuls with fused folded-BN bias / GED / residual.
# K is consumed in one dot (no K grid axis, no accumulator scratch).
# ----------------------------------------------------------------------------
def _mm_kernel(a_ref, w_ref, b_ref, o_ref, *, apply_act, act):
    out = jnp.dot(a_ref[...], w_ref[...], preferred_element_type=jnp.float32)
    out = out + b_ref[...]
    if apply_act:
        out = act(out)
    o_ref[...] = out.astype(o_ref.dtype)


def _mm_res_kernel(a_ref, w_ref, b_ref, r_ref, o_ref, *, act):
    out = jnp.dot(a_ref[...], w_ref[...], preferred_element_type=jnp.float32)
    out = out + b_ref[...] + r_ref[...].astype(jnp.float32)
    o_ref[...] = act(out).astype(o_ref.dtype)


def _mm_dual_kernel(a_ref, w_ref, s_ref, ws_ref, b_ref, o_ref, *, act):
    # fused conv3 + projection shortcut: two dots into the same accumulator
    out = jnp.dot(a_ref[...], w_ref[...], preferred_element_type=jnp.float32)
    out = out + jnp.dot(s_ref[...], ws_ref[...],
                        preferred_element_type=jnp.float32)
    out = out + b_ref[...]
    o_ref[...] = act(out).astype(o_ref.dtype)


_WEIGHT_RESIDENT_BYTES = 6 * 1024 * 1024   # keep (K,N) weight panel resident below this
_X_TILE_BYTES = 4 * 1024 * 1024            # cap on the bf16 activation tile


def _pick_tiles_1x1(M, K_total, N):
    # N tiling: whole weight panel VMEM-resident (constant block index ->
    # DMA'd once) when small; otherwise 256-wide for v6e's 256x256 MXU.
    if K_total * N * 2 <= _WEIGHT_RESIDENT_BYTES:
        tn = N
    elif N % 256 == 0:
        tn = 256
    else:
        tn = 128
    # TODO(synk): when tn < N the (K, tn) weight block is re-streamed once per
    # M tile; a weight-stationary loop order would remove that traffic.

    # M tiling: large tiles for the memory-bound 1x1 layers, minimizing padding.
    if M <= 128:
        tm = _round_up(max(M, 8), 8)
    else:
        tm = min((1024, 512, 256, 128), key=lambda t: (_round_up(M, t), -t))
    while tm > 128 and tm * K_total * 2 > _X_TILE_BYTES:
        tm //= 2
    # Guarantee >= 2 grid tiles on a parallel axis so both v7x TCs get work.
    if (pl.cdiv(M, tm) * pl.cdiv(N, tn)) == 1 and M >= 16:
        tm = _round_up((M + 1) // 2, 8)
    return tm, tn


def matmul_bn_ged(a, w, bias, *, sc=None, w_sc=None, residual=None,
                  apply_act=True, out_dtype=jnp.bfloat16,
                  l=0.01, k1=1.0, k2=1.0, p=1.0):
    """out = [GED]( a @ w  [+ sc @ w_sc]  + bias  [+ residual] ).

    a: (M, K) bf16; w: (K, N) bf16 (BN scale pre-folded); bias: (N,) f32.
    sc/w_sc: optional second operand pair (fused projection shortcut).
    residual: optional (M, N) bf16 added before the activation.
    K and N must be multiples of 128 (caller pads channel dims).
    """
    assert sc is None or residual is None
    M, K = a.shape
    N = w.shape[1]
    K2 = sc.shape[1] if sc is not None else 0
    tm, tn = _pick_tiles_1x1(M, K + K2, N)
    Mp = _round_up(M, tm)

    def _pad_rows(z):
        return jnp.pad(z, ((0, Mp - M), (0, 0))) if Mp != M else z

    a = _pad_rows(a)
    if sc is not None:
        sc = _pad_rows(sc)
    if residual is not None:
        residual = _pad_rows(residual)
    bias2 = bias.reshape(1, N).astype(jnp.float32)

    grid = (Mp // tm, N // tn)
    a_spec = pl.BlockSpec((tm, K), lambda i, j: (i, 0))
    w_spec = pl.BlockSpec((K, tn), lambda i, j: (0, j))
    b_spec = pl.BlockSpec((1, tn), lambda i, j: (0, j))
    o_spec = pl.BlockSpec((tm, tn), lambda i, j: (i, j))

    act = functools.partial(_ged_relu, l=l, k1=k1, k2=k2, p=p)
    out_bytes = Mp * N * jnp.dtype(out_dtype).itemsize
    cost = pl.CostEstimate(
        flops=2 * Mp * (K + K2) * N,
        transcendentals=Mp * N if apply_act else 0,
        bytes_accessed=int(2 * (Mp * (K + K2) + (K + K2) * N)
                           + (Mp * N * 2 if residual is not None else 0)
                           + out_bytes))
    cparams = pltpu.CompilerParams(
        dimension_semantics=("parallel", "parallel"),
        vmem_limit_bytes=_vmem_limit_bytes())
    out_shape = jax.ShapeDtypeStruct((Mp, N), out_dtype)

    if sc is not None:
        s_spec = pl.BlockSpec((tm, K2), lambda i, j: (i, 0))
        ws_spec = pl.BlockSpec((K2, tn), lambda i, j: (0, j))
        out = pl.pallas_call(
            functools.partial(_mm_dual_kernel, act=act),
            out_shape=out_shape, grid=grid,
            in_specs=[a_spec, w_spec, s_spec, ws_spec, b_spec],
            out_specs=o_spec, compiler_params=cparams, cost_estimate=cost,
        )(a, w, sc, w_sc, bias2)
    elif residual is not None:
        r_spec = pl.BlockSpec((tm, tn), lambda i, j: (i, j))
        out = pl.pallas_call(
            functools.partial(_mm_res_kernel, act=act),
            out_shape=out_shape, grid=grid,
            in_specs=[a_spec, w_spec, b_spec, r_spec],
            out_specs=o_spec, compiler_params=cparams, cost_estimate=cost,
        )(a, w, bias2, residual)
    else:
        out = pl.pallas_call(
            functools.partial(_mm_kernel, apply_act=apply_act, act=act),
            out_shape=out_shape, grid=grid,
            in_specs=[a_spec, w_spec, b_spec],
            out_specs=o_spec, compiler_params=cparams, cost_estimate=cost,
        )(a, w, bias2)

    return out[:M] if Mp != M else out


# ----------------------------------------------------------------------------
# Fused 3x3 conv + folded-BN bias + GED: in-kernel 9-tap reduction over a
# VMEM-resident, spatially padded, phase-split image tile (no im2col in HBM).
# ----------------------------------------------------------------------------
def _conv3x3_kernel(x_ref, w_ref, b_ref, o_ref, *, Ho, Wo, stride, act):
    C = x_ref.shape[-1]
    acc = jnp.zeros((Ho * Wo, o_ref.shape[-1]), jnp.float32)
    t = 0
    for dy in range(3):
        for dx in range(3):
            qy, ry = dy // stride, dy % stride
            qx, rx = dx // stride, dx % stride
            # contiguous slice thanks to the host-side phase split
            tap = x_ref[:, ry:ry + 1, rx:rx + 1, qy:qy + Ho, qx:qx + Wo, :]
            tap = tap.reshape(Ho * Wo, C)
            acc = acc + jnp.dot(tap, w_ref[t],
                                preferred_element_type=jnp.float32)
            t += 1
    o_ref[0] = act(acc + b_ref[...]).astype(o_ref.dtype)


def conv3x3_bn_ged(x_nhwc, w_taps, bias, *, stride=1, out_dtype=jnp.bfloat16,
                   l=0.01, k1=1.0, k2=1.0, p=1.0):
    """3x3 / pad=1 / stride conv + folded-BN bias + GED.

    x_nhwc: (N, H, W, C) bf16; w_taps: (9, C, Np) bf16; bias: (Np,) f32.
    Returns ((N, Ho*Wo, Np) array in out_dtype, Ho, Wo).
    """
    N, H, W, C = x_nhwc.shape
    Np = w_taps.shape[-1]
    s = stride
    Ho = (H + 2 - 3) // s + 1
    Wo = (W + 2 - 3) // s + 1
    # spatial zero-pad (conv padding=1) rounded up so (H+2, W+2) split by s
    Hp2 = _round_up(H + 2, s)
    Wp2 = _round_up(W + 2, s)
    xp = jnp.pad(x_nhwc, ((0, 0), (1, Hp2 - H - 1), (1, Wp2 - W - 1), (0, 0)))
    # phase split: xp6[n, ry, rx, qy, qx, c] == xp[n, s*qy+ry, s*qx+rx, c],
    # so every tap becomes a contiguous slice inside the kernel.
    if s == 1:
        xp6 = xp.reshape(N, 1, 1, Hp2, Wp2, C)
    else:
        xp6 = xp.reshape(N, Hp2 // s, s, Wp2 // s, s, C).transpose(0, 2, 4, 1, 3, 5)
    Hh, Wh = Hp2 // s, Wp2 // s
    bias2 = bias.reshape(1, Np).astype(jnp.float32)

    act = functools.partial(_ged_relu, l=l, k1=k1, k2=k2, p=p)
    cost = pl.CostEstimate(
        flops=2 * N * Ho * Wo * 9 * C * Np,
        transcendentals=N * Ho * Wo * Np,
        bytes_accessed=int(xp6.size * 2 + w_taps.size * 2
                           + N * Ho * Wo * Np * jnp.dtype(out_dtype).itemsize))

    out = pl.pallas_call(
        functools.partial(_conv3x3_kernel, Ho=Ho, Wo=Wo, stride=s, act=act),
        out_shape=jax.ShapeDtypeStruct((N, Ho * Wo, Np), out_dtype),
        grid=(N,),
        in_specs=[
            # whole phase-split padded image of one batch element per step
            pl.BlockSpec((1, s, s, Hh, Wh, C), lambda n: (n, 0, 0, 0, 0, 0)),
            # all 9 tap weights VMEM-resident (constant block index)
            pl.BlockSpec((9, C, Np), lambda n: (0, 0, 0)),
            pl.BlockSpec((1, Np), lambda n: (0, 0)),
        ],
        out_specs=pl.BlockSpec((1, Ho * Wo, Np), lambda n: (n, 0, 0)),
        compiler_params=pltpu.CompilerParams(
            dimension_semantics=("parallel",),
            vmem_limit_bytes=_vmem_limit_bytes()),
        cost_estimate=cost,
    )(xp6, w_taps, bias2)
    # TODO(synk): for very large H*W add a row-tile grid axis with halo'd
    # blocks instead of one whole image per grid step.
    return out, Ho, Wo


# ----------------------------------------------------------------------------
# Glue: padding, BN folding, parameter construction, forward
# ----------------------------------------------------------------------------
def _pad_last(a, to=128):
    c = a.shape[-1]
    cp = _round_up(c, to)
    if cp == c:
        return a
    pad = [(0, 0)] * (a.ndim - 1) + [(0, cp - c)]
    return jnp.pad(a, pad)


def fold_bn(gamma, beta, mean, var, eps=1e-5):
    scale = gamma / jnp.sqrt(var + eps)
    bias = beta - mean * scale
    return scale.astype(jnp.float32), bias.astype(jnp.float32)


def make_bn_params(key, c):
    ka, kb, kc, kd = jax.random.split(key, 4)
    gamma = 1.0 + 0.1 * jax.random.normal(ka, (c,), jnp.float32)
    beta = 0.1 * jax.random.normal(kb, (c,), jnp.float32)
    mean = 0.1 * jax.random.normal(kc, (c,), jnp.float32)
    var = jnp.abs(jax.random.normal(kd, (c,), jnp.float32)) + 0.5
    return fold_bn(gamma, beta, mean, var)


def make_params(key, in_planes, planes, stride, expansion=4):
    ks = jax.random.split(key, 8)
    out_planes = expansion * planes
    params = {
        "w1": 0.1 * jax.random.normal(ks[0], (in_planes, planes), jnp.float32),
        "w2": 0.1 * jax.random.normal(ks[1], (3, 3, planes, planes), jnp.float32),  # HWIO
        "w3": 0.1 * jax.random.normal(ks[2], (planes, out_planes), jnp.float32),
        "bn1": make_bn_params(ks[3], planes),
        "bn2": make_bn_params(ks[4], planes),
        "bn3": make_bn_params(ks[5], out_planes),
    }
    if stride != 1 or in_planes != out_planes:
        params["w_sc"] = 0.1 * jax.random.normal(ks[6], (in_planes, out_planes), jnp.float32)
        params["bn_sc"] = make_bn_params(ks[7], out_planes)
    return params


def prepare_params(params, in_planes, planes, expansion=4):
    """Fold BN scales into weights, zero-pad channels to 128 lanes, cast bf16."""
    out_planes = expansion * planes
    cin_p = _round_up(in_planes, 128)
    pl_p = _round_up(planes, 128)
    cout_p = _round_up(out_planes, 128)

    s1, b1 = params["bn1"]
    s2, b2 = params["bn2"]
    s3, b3 = params["bn3"]

    w1 = params["w1"] * s1[None, :]
    w1 = jnp.pad(w1, ((0, cin_p - in_planes), (0, pl_p - planes))).astype(jnp.bfloat16)
    b1p = jnp.pad(b1, (0, pl_p - planes))

    w2 = params["w2"] * s2[None, None, None, :]
    w2 = jnp.pad(w2, ((0, 0), (0, 0), (0, pl_p - planes), (0, pl_p - planes)))
    w2 = w2.reshape(9, pl_p, pl_p).astype(jnp.bfloat16)     # tap-major (dy*3+dx)
    b2p = jnp.pad(b2, (0, pl_p - planes))

    w3 = params["w3"] * s3[None, :]
    w3 = jnp.pad(w3, ((0, pl_p - planes), (0, cout_p - out_planes))).astype(jnp.bfloat16)
    b3p = jnp.pad(b3, (0, cout_p - out_planes))

    prep = dict(w1=w1, b1=b1p, w2=w2, b2=b2p, w3=w3, b3=b3p,
                cin_p=cin_p, pl_p=pl_p, cout_p=cout_p,
                planes=planes, out_planes=out_planes, has_proj=False)

    if "w_sc" in params:
        ssc, bsc = params["bn_sc"]
        wsc = params["w_sc"] * ssc[None, :]
        wsc = jnp.pad(wsc, ((0, cin_p - in_planes),
                            (0, cout_p - out_planes))).astype(jnp.bfloat16)
        prep["w_sc"] = wsc
        prep["b3sc"] = b3p + jnp.pad(bsc, (0, cout_p - out_planes))
        prep["has_proj"] = True
    return prep


def ged_bottleneck_forward(x_nchw, prep, *, stride=1, l=0.01, k1=1.0, k2=1.0, p=1.0):
    act_kw = dict(l=l, k1=k1, k2=k2, p=p)
    N, Cin, H, W = x_nchw.shape
    cin_p, pl_p = prep["cin_p"], prep["pl_p"]
    out_planes = prep["out_planes"]

    x = jnp.transpose(x_nchw, (0, 2, 3, 1))                    # NHWC
    x_pad = _pad_last(x, 128).astype(jnp.bfloat16)             # (N,H,W,cin_p) bf16
    x2d = x_pad.reshape(N * H * W, cin_p)

    # conv1 (1x1) + bn1 + act1 : single-K-tile matmul, bf16 intermediate
    out1 = matmul_bn_ged(x2d, prep["w1"], prep["b1"], apply_act=True, **act_kw)
    out1 = out1.reshape(N, H, W, pl_p)

    # conv2 (3x3, stride, pad=1) + bn2 + act2 : fused 9-tap reduction, no im2col
    out2, Ho, Wo = conv3x3_bn_ged(out1, prep["w2"], prep["b2"], stride=stride, **act_kw)
    M2 = N * Ho * Wo
    out2 = out2.reshape(M2, pl_p)

    # shortcut rows (no copy for stride == 1)
    if stride == 1:
        x_s = x2d
    else:
        # TODO(synk): feed the strided shortcut rows through a strided
        # BlockSpec index_map instead of this small host-side gather.
        x_s = x_pad[:, ::stride, ::stride, :].reshape(M2, cin_p)

    if prep["has_proj"]:
        # fused conv3 + projection shortcut: two dots into the same accumulator
        out3 = matmul_bn_ged(out2, prep["w3"], prep["b3sc"],
                             sc=x_s, w_sc=prep["w_sc"], apply_act=True, **act_kw)
    else:
        # identity shortcut fused as a residual add in the conv3 epilogue
        out3 = matmul_bn_ged(out2, prep["w3"], prep["b3"], residual=x_s,
                             apply_act=True, **act_kw)

    out = out3[:, :out_planes].reshape(N, Ho, Wo, out_planes)
    return jnp.transpose(out, (0, 3, 1, 2))                    # back to NCHW (bf16)


# ----------------------------------------------------------------------------
# Pure-JAX f32 reference (same GED formula) for correctness checks
# ----------------------------------------------------------------------------
def ref_forward(x_nchw, params, *, stride=1, l=0.01, k1=1.0, k2=1.0, p=1.0):
    dn = ("NHWC", "HWIO", "NHWC")
    x = jnp.transpose(x_nchw, (0, 2, 3, 1)).astype(jnp.float32)
    in_planes = x.shape[-1]
    planes = params["w1"].shape[1]

    s1, b1 = params["bn1"]
    o = lax.conv_general_dilated(x, params["w1"].reshape(1, 1, in_planes, planes),
                                 (1, 1), "VALID", dimension_numbers=dn)
    o = _ged_relu(o * s1 + b1, l, k1, k2, p)

    s2, b2 = params["bn2"]
    o = lax.conv_general_dilated(o, params["w2"], (stride, stride),
                                 ((1, 1), (1, 1)), dimension_numbers=dn)
    o = _ged_relu(o * s2 + b2, l, k1, k2, p)

    s3, b3 = params["bn3"]
    out_planes = params["w3"].shape[1]
    o = lax.conv_general_dilated(o, params["w3"].reshape(1, 1, planes, out_planes),
                                 (1, 1), "VALID", dimension_numbers=dn)
    o = o * s3 + b3

    if "w_sc" in params:
        s_sc, b_sc = params["bn_sc"]
        sc = lax.conv_general_dilated(x, params["w_sc"].reshape(1, 1, in_planes, out_planes),
                                      (stride, stride), "VALID", dimension_numbers=dn)
        sc = sc * s_sc + b_sc
    else:
        sc = x[:, ::stride, ::stride, :]

    o = _ged_relu(o + sc, l, k1, k2, p)
    return jnp.transpose(o, (0, 3, 1, 2))


# ----------------------------------------------------------------------------
if __name__ == "__main__":
    key = jax.random.PRNGKey(0)

    # (in_planes, planes, stride): projection / identity / strided projection
    configs = [(16, 8, 1), (32, 8, 1), (16, 8, 2)]
    N, H, W = 2, 8, 8

    for cfg_i, (in_planes, planes, stride) in enumerate(configs):
        kx, kp, key = jax.random.split(key, 3)
        x = jax.random.normal(kx, (N, in_planes, H, W), jnp.float32)
        params = make_params(kp, in_planes, planes, stride)
        prep = prepare_params(params, in_planes, planes)

        out = jax.block_until_ready(ged_bottleneck_forward(x, prep, stride=stride))
        ref = jax.block_until_ready(ref_forward(x, params, stride=stride))

        Ho = (H + 2 - 3) // stride + 1
        assert out.shape == (N, 4 * planes, Ho, Ho), (cfg_i, out.shape)
        rel_err = float(jnp.max(jnp.abs(out - ref)) / (jnp.max(jnp.abs(ref)) + 1e-6))
        assert rel_err < 5e-2, (cfg_i, rel_err)   # bf16 matmul inputs / intermediates

    print("KERNEL_OK")
</pallas_src>

<mosaic_0001>
module attributes {stable_mosaic.version = 11 : i64} {
  func.func @_mm_kernel(%arg0: i32, %arg1: i32, %arg2: memref<64x128xbf16, #tpu.memory_space<vmem>>, %arg3: memref<128x128xbf16, #tpu.memory_space<vmem>>, %arg4: memref<1x128xf32, #tpu.memory_space<vmem>>, %arg5: memref<64x128xbf16, #tpu.memory_space<vmem>>) attributes {dimension_semantics = [#tpu.dimension_semantics<parallel>, #tpu.dimension_semantics<parallel>], iteration_bounds = array<i64: 2, 1>, scalar_prefetch = 0 : i64, scratch_operands = 0 : i64, tpu.core_type = #tpu.core_type<tc>, window_params = [{transform_indices = @transform_0, window_bounds = array<i64: 64, 128>}, {transform_indices = @transform_1, window_bounds = array<i64: 128, 128>}, {transform_indices = @transform_2, window_bounds = array<i64: 1, 128>}, {transform_indices = @transform_3, window_bounds = array<i64: 64, 128>}]} {
    %c0 = arith.constant 0 : index
    %c0_0 = arith.constant 0 : index
    %0 = vector.load %arg2[%c0, %c0_0] : memref<64x128xbf16, #tpu.memory_space<vmem>>, vector<64x128xbf16>
    %c0_1 = arith.constant 0 : index
    %c0_2 = arith.constant 0 : index
    %1 = vector.load %arg3[%c0_1, %c0_2] : memref<128x128xbf16, #tpu.memory_space<vmem>>, vector<128x128xbf16>
    %cst = arith.constant dense<0.000000e+00> : vector<64x128xf32>
    %2 = tpu.matmul %0, %1, %cst {dimension_numbers = #tpu.dot_dimension_numbers<[1], [0], [0], [1], [0, 0, 1, 1], [], []>} : vector<64x128xbf16>, vector<128x128xbf16>, vector<64x128xf32> -> vector<64x128xf32>
    %c0_3 = arith.constant 0 : index
    %c0_4 = arith.constant 0 : index
    %3 = vector.load %arg4[%c0_3, %c0_4] : memref<1x128xf32, #tpu.memory_space<vmem>>, vector<1x128xf32>
    %4 = vector.broadcast %3 : vector<1x128xf32> to vector<64x128xf32>
    %5 = arith.addf %2, %4 : vector<64x128xf32>
    %cst_5 = arith.constant 0.000000e+00 : f32
    %6 = vector.broadcast %cst_5 : f32 to vector<64x128xf32>
    %7 = arith.minimumf %5, %6 : vector<64x128xf32>
    %cst_6 = arith.constant 1.000000e+00 : f32
    %8 = vector.broadcast %cst_6 : f32 to vector<64x128xf32>
    %9 = arith.mulf %8, %7 : vector<64x128xf32>
    %10 = math.exp %9 : vector<64x128xf32>
    %cst_7 = arith.constant 1.000000e+00 : f32
    %11 = vector.broadcast %cst_7 : f32 to vector<64x128xf32>
    %12 = arith.subf %10, %11 : vector<64x128xf32>
    %cst_8 = arith.constant 0.00999999977 : f32
    %13 = vector.broadcast %cst_8 : f32 to vector<64x128xf32>
    %14 = arith.mulf %13, %12 : vector<64x128xf32>
    %cst_9 = arith.constant 0.000000e+00 : f32
    %15 = vector.broadcast %cst_9 : f32 to vector<64x128xf32>
    %16 = arith.cmpf ogt, %5, %15 : vector<64x128xf32>
    %cst_10 = arith.constant 1.000000e+00 : f32
    %17 = vector.broadcast %cst_10 : f32 to vector<64x128xf32>
    %18 = arith.mulf %17, %5 : vector<64x128xf32>
    %19 = arith.select %16, %18, %14 : vector<64x128xi1>, vector<64x128xf32>
    %20 = arith.truncf %19 : vector<64x128xf32> to vector<64x128xbf16>
    %c0_11 = arith.constant 0 : index
    %c0_12 = arith.constant 0 : index
    %21 = vector.load %arg5[%c0_11, %c0_12] : memref<64x128xbf16, #tpu.memory_space<vmem>>, vector<64x128xbf16>
    tpu.vector_store %arg5[%c0_11, %c0_12], %20 {strides = array<i32>} : memref<64x128xbf16, #tpu.memory_space<vmem>>, vector<64x128xbf16>,
    return
  }
  func.func @transform_0(%arg0: i32, %arg1: i32) -> (i32, i32) {
    %c0_i32 = arith.constant 0 : i32
    %c0_i32_0 = arith.constant 0 : i32
    return %arg0, %c0_i32 : i32, i32
  }
  func.func @transform_1(%arg0: i32, %arg1: i32) -> (i32, i32) {
    %c0_i32 = arith.constant 0 : i32
    %c0_i32_0 = arith.constant 0 : i32
    return %c0_i32, %arg1 : i32, i32
  }
  func.func @transform_2(%arg0: i32, %arg1: i32) -> (i32, i32) {
    %c0_i32 = arith.constant 0 : i32
    %c0_i32_0 = arith.constant 0 : i32
    return %c0_i32, %arg1 : i32, i32
  }
  func.func @transform_3(%arg0: i32, %arg1: i32) -> (i32, i32) {
    %c0_i32 = arith.constant 0 : i32
    return %arg0, %arg1 : i32, i32
  }
}

</mosaic_0001>

<llo_original>
// kernel: tpu_custom_call.1
$region0: #{tpu_custom_call.1}
  #allocation0 [shape = 'u32[]', space=smem, size = 0x4, offset = 0x4, fixed_abs, tag = 'smem constant byte address 0x4 - core index']
  #allocation1 [shape = 'u32[144,128]{1,0:T(1,128)}', space=vmem, size = 0x12000, scoped, tag = 'internal scratch']
  %s0 = inlined_call_operand.hbm [shape: bf16[128,128], index: 0, kind: input, shape index: {}]
  %s1 = inlined_call_operand.hbm [shape: bf16[128,128], index: 1, kind: input, shape index: {}]
  %s2 = inlined_call_operand.vmem [shape: f32[1,128], index: 2, kind: input, shape index: {}]
  %s3 = inlined_call_operand.hbm [shape: bf16[128,128], index: 3, kind: output, shape index: {}]
  %s4 = sld [smem:[#allocation0]]
  $region53: #{tpu_custom_call.1} parent=0
    _
  %s6 = ssub.s32 1, %s4
  %s7 = scalar_select 0, %s6, %s4
  $region1: #{tpu_custom_call.1} parent=0
    #allocation2 [shape = 'u8[32768]{0}', space=vmem, size = 0x8000, scoped, tag = 'input window, operand 0']
    #allocation3 [shape = 's32[2]{0}', space=sflag, size = 0x8, scoped, tag = 'scoped memory for tpu_custom_call.1']
    #allocation4 [shape = 's32[2]{0}', space=sflag, size = 0x8, scoped, tag = 'scoped memory for tpu_custom_call.1']
    #allocation5 [shape = 'u8[32768]{0}', space=vmem, size = 0x8000, scoped, tag = 'input window, operand 1, single buffered']
    #allocation6 [shape = 's32[1]{0}', space=sflag, size = 0x4, scoped, tag = 'scoped memory for tpu_custom_call.1']
    #allocation7 [shape = 'u8[32768]{0}', space=vmem, size = 0x8000, scoped, tag = 'output window, operand 0']
    %8 = vsyncpa [#allocation3], 0
    %s9 = scalar_lea.sflag [#allocation3], 1
    %10 = vsyncpa %s9, 0
    %11 = vsyncpa [#allocation6], 0
    %12 = vsyncpa [#allocation4], 0
    %s13 = scalar_lea.sflag [#allocation4], 1
    %14 = vsyncpa %s13, 0
    loop: start=0, step=1, limit=4
    $region2: #{tpu_custom_call.1} parent=1 // loop_pre_header
      _
    $region3: #{tpu_custom_call.1} parent=1 // loop_header
      %s16 = sphi 0, %s20
      %p17 = scmp.ge.s32.totalorder %s16, 4
      %s23 = sphi 0, %s35
      %s24 = sphi 0, %s31
      %s25 = sphi 0, %s23
      %s26 = sphi 0, %s24
      %s27 = sphi 0, %s25
      %s28 = sphi 0, %s26
      %s38 = sphi 0, %s40
      %s41 = sphi 0, %s38
      %s42 = sphi 0, %s41
      %s58 = sphi 0, %s42
      %s64 = sphi 0, %s66
      %s67 = sphi 0, %s64
      %s68 = sphi 0, %s67
      %s84 = sphi 0, %s68
      %s90 = sphi 0, %s92
      %s93 = sphi 0, %s90
      %s94 = sphi 0, %s93
      %s110 = sphi 0, %s94
      %s118 = sphi 0, %s120
      %s121 = sphi 0, %s118
      %s122 = sphi 0, %s121
      %s138 = sphi 0, %s122
    $region4: #{tpu_custom_call.1} parent=1 // loop_header_branch
      %19 = sbr.rel (%p17) target = $region8
    $region5: #{tpu_custom_call.1} parent=1 // loop_body
      %s21 = ssub.s32 %s16, 1
      %s22 = ssub.s32 %s16, 2
      %s29 = sadd.s32 1, %s24
      %p30 = scmp.ge.s32.totalorder %s29, 1
      %s31 = scalar_select %p30, 0, %s29
      %s32 = sadd.s32 1, %s23
      %s33 = scalar_select %p30, %s32, %s23
      %p34 = scmp.ge.s32.totalorder %s33, 2
      %s35 = scalar_select %p34, 0, %s33
      %s36 = ssub.s32 %s23, %s35
      %p37 = scmp.eq.s32.totalorder %s36, 0
      %s39 = sadd.s32 %s38, 1
      %s40 = scalar_select %p37, %s38, %s39
      %p43 = pneg %p37
      %p44 = scmp.eq.s32.totalorder %s16, 1
      %p45 = por %p43, %p44
      %p46 = scmp.ne.s32.totalorder %s38, %s41
      %p47 = scmp.eq.s32.totalorder %s16, 0
      %p48 = por %p46, %p47
      %p49 = scmp.ne.s32.totalorder %s38, %s41
      %p50 = scmp.eq.s32.totalorder %s21, 1
      %p51 = por %p49, %p50
      %p52 = scmp.ne.s32.totalorder %s41, %s42
      %p53 = scmp.eq.s32.totalorder %s21, 0
      %p54 = por %p52, %p53
      %p55 = scmp.ne.s32.totalorder %s41, %s42
      %p56 = scmp.eq.s32.totalorder %s22, 1
      %p57 = por %p55, %p56
      %p59 = scmp.ne.s32.totalorder %s42, %s58
      %p60 = scmp.eq.s32.totalorder %s22, 0
      %p61 = por %p59, %p60
      %s62 = ssub.s32 %s24, %s31
      %p63 = scmp.eq.s32.totalorder %s62, 0
      %s65 = sadd.s32 %s64, 1
      %s66 = scalar_select %p63, %s64, %s65
      %p69 = pneg %p63
      %p70 = scmp.eq.s32.totalorder %s16, 1
      %p71 = por %p69, %p70
      %p72 = scmp.ne.s32.totalorder %s64, %s67
      %p73 = scmp.eq.s32.totalorder %s16, 0
      %p74 = por %p72, %p73
      %p75 = scmp.ne.s32.totalorder %s64, %s67
      %p76 = scmp.eq.s32.totalorder %s21, 1
      %p77 = por %p75, %p76
      %p78 = scmp.ne.s32.totalorder %s67, %s68
      %p79 = scmp.eq.s32.totalorder %s21, 0
      %p80 = por %p78, %p79
      %p81 = scmp.ne.s32.totalorder %s67, %s68
      %p82 = scmp.eq.s32.totalorder %s22, 1
      %p83 = por %p81, %p82
      %p85 = scmp.ne.s32.totalorder %s68, %s84
      %p86 = scmp.eq.s32.totalorder %s22, 0
      %p87 = por %p85, %p86
      %s88 = ssub.s32 %s24, %s31
      %p89 = scmp.eq.s32.totalorder %s88, 0
      %s91 = sadd.s32 %s90, 1
      %s92 = scalar_select %p89, %s90, %s91
      %p95 = pneg %p89
      %p96 = scmp.eq.s32.totalorder %s16, 1
      %p97 = por %p95, %p96
      %p98 = scmp.ne.s32.totalorder %s90, %s93
      %p99 = scmp.eq.s32.totalorder %s16, 0
      %p100 = por %p98, %p99
      %p101 = scmp.ne.s32.totalorder %s90, %s93
      %p102 = scmp.eq.s32.totalorder %s21, 1
      %p103 = por %p101, %p102
      %p104 = scmp.ne.s32.totalorder %s93, %s94
      %p105 = scmp.eq.s32.totalorder %s21, 0
      %p106 = por %p104, %p105
      %p107 = scmp.ne.s32.totalorder %s93, %s94
      %p108 = scmp.eq.s32.totalorder %s22, 1
      %p109 = por %p107, %p108
      %p111 = scmp.ne.s32.totalorder %s94, %s110
      %p112 = scmp.eq.s32.totalorder %s22, 0
      %p113 = por %p111, %p112
      %s114 = ssub.s32 %s23, %s35
      %s115 = ssub.s32 %s24, %s31
      %s116 = sor.u32 %s114, %s115
      %p117 = scmp.eq.s32.totalorder %s116, 0
      %s119 = sadd.s32 %s118, 1
      %s120 = scalar_select %p117, %s118, %s119
      %p123 = pneg %p117
      %p124 = scmp.eq.s32.totalorder %s16, 1
      %p125 = por %p123, %p124
      %p126 = scmp.ne.s32.totalorder %s118, %s121
      %p127 = scmp.eq.s32.totalorder %s16, 0
      %p128 = por %p126, %p127
      %p129 = scmp.ne.s32.totalorder %s118, %s121
      %p130 = scmp.eq.s32.totalorder %s21, 1
      %p131 = por %p129, %p130
      %p132 = scmp.ne.s32.totalorder %s121, %s122
      %p133 = scmp.eq.s32.totalorder %s21, 0
      %p134 = por %p132, %p133
      %p135 = scmp.ne.s32.totalorder %s121, %s122
      %p136 = scmp.eq.s32.totalorder %s22, 1
      %p137 = por %p135, %p136
      %p139 = scmp.ne.s32.totalorder %s122, %s138
      %p140 = scmp.eq.s32.totalorder %s22, 0
      %p141 = por %p139, %p140
      %p142 = scmp.le.s32.totalorder 1, %s16
      %p143 = scmp.lt.s32.totalorder %s16, 3
      %p144 = pnand %p142, %p143
      %p145 = pneg %p144
      // Predicated region
      $region9: #{tpu_custom_call.1} parent=5 // pred_check
        _
      $region10: #{tpu_custom_call.1} parent=5 // pred_check_branch
        %147 = sbr.rel (%p144) target = $region12
      $region11: #{tpu_custom_call.1} parent=5 // pred_region
        %s148 = ssub.s32 %s16, 1
        // Predicated region
        $region13: #{tpu_custom_call.1} parent=11 // pred_check
          %p149 = pneg %p80
        $region14: #{tpu_custom_call.1} parent=11 // pred_check_branch
          %151 = sbr.rel (%p149) target = $region16
        $region15: #{tpu_custom_call.1} parent=11 // pred_region
          %s153 = ssub.s32 1024, 1024
          %154 = vsyncadd [#allocation6], %s153
          %s155 = smul.addr %s26, 64
          %s156 = scalar_lea.hbm %s1, %s155
          %s157 = sshll.u32 [#allocation5], 4
          %s158 = int_to_ptr.vmem [resolvable:$true] %s157
          %163 = dma.hbm_to_vmem [thread:$0]  %s156, 1024, %s158, [#allocation6], 64, 64, 4
        $region16: #{tpu_custom_call.1} parent=11 // pred_fallthru
          _
        // Predicated region
        $region17: #{tpu_custom_call.1} parent=11 // pred_check
          %p164 = pneg %p106
        $region18: #{tpu_custom_call.1} parent=11 // pred_check_branch
          %166 = sbr.rel (%p164) target = $region20
        $region19: #{tpu_custom_call.1} parent=11 // pred_region
          %p167 = scmp.lt.s32.totalorder %s26, 0
          %s168 = scalar_select %p167, %s26, 0
          %s169 = scalar_lea.vmem %s2, %s168
        $region20: #{tpu_custom_call.1} parent=11 // pred_fallthru
          _
      $region12: #{tpu_custom_call.1} parent=5 // pred_fallthru
        _
      %p170 = scmp.lt.s32.totalorder %s16, 2
      // Predicated region
      $region21: #{tpu_custom_call.1} parent=5 // pred_check
        %p171 = pneg %p170
      $region22: #{tpu_custom_call.1} parent=5 // pred_check_branch
        %173 = sbr.rel (%p171) target = $region24
      $region23: #{tpu_custom_call.1} parent=5 // pred_region
        // Predicated region
        $region25: #{tpu_custom_call.1} parent=23 // pred_check
          %p174 = pneg %p48
        $region26: #{tpu_custom_call.1} parent=23 // pred_check_branch
          %176 = sbr.rel (%p174) target = $region28
        $region27: #{tpu_custom_call.1} parent=23 // pred_region
          %s177 = sand.u32 %s38, 1
          %s178 = scalar_lea.sflag [#allocation3], %s177
          %s179 = sand.u32 %s38, 1
          %s180 = smul.addr %s179, 32
          %s181 = scalar_lea.vmem [#allocation2], %s180
          %s182 = smul.u32 8, %s23
          %s184 = ssub.s32 512, 512
          %185 = vsyncadd %s178, %s184
          %s186 = smul.addr %s182, 64
          %s187 = scalar_lea.hbm %s0, %s186
          %s188 = sshll.u32 %s181, 4
          %s189 = int_to_ptr.vmem [resolvable:$true] %s188
          %194 = dma.hbm_to_vmem [thread:$0]  %s187, 512, %s189, %s178, 64, 64, 4
        $region28: #{tpu_custom_call.1} parent=23 // pred_fallthru
          _
      $region24: #{tpu_custom_call.1} parent=5 // pred_fallthru
        _
      %p195 = scmp.le.s32.totalorder 1, %s16
      %p196 = scmp.lt.s32.totalorder %s16, 3
      %p197 = pnand %p195, %p196
      %p198 = pneg %p197
      // Predicated region
      $region29: #{tpu_custom_call.1} parent=5 // pred_check
        _
      $region30: #{tpu_custom_call.1} parent=5 // pred_check_branch
        %200 = sbr.rel (%p197) target = $region32
      $region31: #{tpu_custom_call.1} parent=5 // pred_region
        %s201 = ssub.s32 %s16, 1
        %s202 = sand.u32 %s41, 1
        %s203 = scalar_lea.sflag [#allocation3], %s202
        %s204 = sand.u32 %s41, 1
        %s205 = smul.addr %s204, 32
        %s206 = scalar_lea.vmem [#allocation2], %s205
        // Predicated region
        $region33: #{tpu_custom_call.1} parent=31 // pred_check
          %p207 = pneg %p54
        $region34: #{tpu_custom_call.1} parent=31 // pred_check_branch
          %209 = sbr.rel (%p207) target = $region36
        $region35: #{tpu_custom_call.1} parent=31 // pred_region
          %210 = dma.done %s203, 512
        $region36: #{tpu_custom_call.1} parent=31 // pred_fallthru
          _
        // Predicated region
        $region37: #{tpu_custom_call.1} parent=31 // pred_check
          %p211 = pneg %p80
        $region38: #{tpu_custom_call.1} parent=31 // pred_check_branch
          %213 = sbr.rel (%p211) target = $region40
        $region39: #{tpu_custom_call.1} parent=31 // pred_region
          %214 = dma.done [#allocation6], 1024
        $region40: #{tpu_custom_call.1} parent=31 // pred_fallthru
          _
        %s215 = sand.u32 %s41, 1
        %s216 = scalar_lea.sflag [#allocation3], %s215
        %s217 = sand.u32 %s41, 1
        %s218 = smul.addr %s217, 32
        %s219 = scalar_lea.vmem [#allocation2], %s218
        %p220 = pneg %p54
        %p221 = pneg %p51
        %p222 = pneg %p80
        %p223 = pneg %p77
        %p224 = scmp.lt.s32.totalorder %s26, 0
        %s225 = scalar_select %p224, %s26, 0
        %s226 = scalar_lea.vmem %s2, %s225
        %p227 = pneg %p106
        %p228 = pneg %p103
        %p229 = pneg %p134
        %p230 = pneg %p131
        %s231 = sand.u32 %s121, 1
        %s232 = scalar_lea.sflag [#allocation4], %s231
        %s233 = sand.u32 %s121, 1
        %s234 = smul.addr %s233, 32
        %s235 = scalar_lea.vmem [#allocation7], %s234
        %s236 = smul.u32 8, %s25
        %p237 = scmp.lt.s32.totalorder %s26, 0
        %s238 = scalar_select %p237, %s26, 0
        %s239 = scalar_lea.vmem %s2, %s238
        %s240 = smul.u32 8, %s25
        %v242 = vld [vmem:[%s206] sm:$0xf]
        %v243 = vld [vmem:[%s206 + $0x4] sm:$0xf]
        %v244 = vld [vmem:[%s206 + $0x8] sm:$0xf]
        %v245 = vld [vmem:[%s206 + $0xc] sm:$0xf]
        %v246 = vld [vmem:[%s206 + $0x10] sm:$0xf]
        %v247 = vld [vmem:[%s206 + $0x14] sm:$0xf]
        %v248 = vld [vmem:[%s206 + $0x18] sm:$0xf]
        %v249 = vld [vmem:[%s206 + $0x1c] sm:$0xf]
        %v250 = vld [vmem:[#allocation5] sm:$0xf]
        %v251 = vld [vmem:[#allocation5 + $0x4] sm:$0xf]
        %v252 = vld [vmem:[#allocation5 + $0x8] sm:$0xf]
        %v253 = vld [vmem:[#allocation5 + $0xc] sm:$0xf]
        %v254 = vld [vmem:[#allocation5 + $0x10] sm:$0xf]
        %v255 = vld [vmem:[#allocation5 + $0x14] sm:$0xf]
        %v256 = vld [vmem:[#allocation5 + $0x18] sm:$0xf]
        %v257 = vld [vmem:[#allocation5 + $0x1c] sm:$0xf]
        %v258 = vld [vmem:[#allocation5 + $0x20] sm:$0xf]
        %v259 = vld [vmem:[#allocation5 + $0x24] sm:$0xf]
        %v260 = vld [vmem:[#allocation5 + $0x28] sm:$0xf]
        %v261 = vld [vmem:[#allocation5 + $0x2c] sm:$0xf]
        %v262 = vld [vmem:[#allocation5 + $0x30] sm:$0xf]
        %v263 = vld [vmem:[#allocation5 + $0x34] sm:$0xf]
        %v264 = vld [vmem:[#allocation5 + $0x38] sm:$0xf]
        %v265 = vld [vmem:[#allocation5 + $0x3c] sm:$0xf]
        %v266 = vld [vmem:[%s239] sm:$0x1]
        %v268 = vlaneseq
        %v269 = vshrl.u32 %v268, 7
        %v270 = vsub.s32 0, %v269
        %v271 = vrot.slane %v266, %v270
        %v281 = vunpack.c.l.b16 %v242
        %v282 = vunpack.c.l.b16 %v243
        %v283 = vunpack.c.l.b16 %v244
        %v284 = vunpack.c.l.b16 %v245
        %v285 = vunpack.c.l.b16 %v246
        %v286 = vunpack.c.l.b16 %v247
        %v287 = vunpack.c.l.b16 %v248
        %v288 = vunpack.c.l.b16 %v249
        %v289 = vpack.c.b16 %v282, %v281
        %v290 = vpack.c.b16 %v284, %v283
        %v291 = vpack.c.b16 %v286, %v285
        %v292 = vpack.c.b16 %v288, %v287
        %v313 = vunpack.c.l.b16 %v250
        %v314 = vunpack.c.l.b16 %v251
        %v315 = vunpack.c.l.b16 %v252
        %v316 = vunpack.c.l.b16 %v253
        %v317 = vunpack.c.l.b16 %v254
        %v318 = vunpack.c.l.b16 %v255
        %v319 = vunpack.c.l.b16 %v256
        %v320 = vunpack.c.l.b16 %v257
        %v321 = vunpack.c.l.b16 %v258
        %v322 = vunpack.c.l.b16 %v259
        %v323 = vunpack.c.l.b16 %v260
        %v324 = vunpack.c.l.b16 %v261
        %v325 = vunpack.c.l.b16 %v262
        %v326 = vunpack.c.l.b16 %v263
        %v327 = vunpack.c.l.b16 %v264
        %v328 = vunpack.c.l.b16 %v265
        %v329 = vpack.c.b16 %v314, %v313
        %v330 = vpack.c.b16 %v316, %v315
        %v331 = vpack.c.b16 %v318, %v317
        %v332 = vpack.c.b16 %v320, %v319
        %v333 = vpack.c.b16 %v322, %v321
        %v334 = vpack.c.b16 %v324, %v323
        %v335 = vpack.c.b16 %v326, %v325
        %v336 = vpack.c.b16 %v328, %v327
        %345 = vmatprep.subr.bf16.mxu0 0
        %346 = vmatpush1.bf16.msra.mxu0 %v336
        %347 = vmatprep.subr.bf16.mxu0 0
        %348 = vmatpush1.bf16.msra.mxu0 %v335
        %349 = vmatprep.subr.bf16.mxu0 0
        %350 = vmatpush1.bf16.msra.mxu0 %v334
        %351 = vmatprep.subr.bf16.mxu0 0
        %352 = vmatpush1.bf16.msra.mxu0 %v333
        %353 = vmatprep.subr.bf16.mxu0 0
        %354 = vmatpush1.bf16.msra.mxu0 %v332
        %355 = vmatprep.subr.bf16.mxu0 0
        %356 = vmatpush1.bf16.msra.mxu0 %v331
        %357 = vmatprep.subr.bf16.mxu0 0
        %358 = vmatpush1.bf16.msra.mxu0 %v330
        %359 = vmatprep.subr.bf16.mxu0 0
        %360 = vmatpush1.bf16.msra.mxu0 %v329
        %361 = vmatprep.subr.bf16.mxu0 0
        %362 = vmatpush2.bf16.msra.mxu0 0
        %363 = vmatprep.subr.bf16.mxu0 0
        %364 = vmatpush2.bf16.msra.mxu0 0
        %365 = vmatprep.subr.bf16.mxu0 0
        %366 = vmatpush2.bf16.msra.mxu0 0
        %367 = vmatprep.subr.bf16.mxu0 0
        %368 = vmatpush2.bf16.msra.mxu0 0
        %369 = vmatprep.subr.bf16.mxu0 0
        %370 = vmatpush2.bf16.msra.mxu0 0
        %371 = vmatprep.subr.bf16.mxu0 0
        %372 = vmatpush2.bf16.msra.mxu0 0
        %373 = vmatprep.subr.bf16.mxu0 0
        %374 = vmatpush2.bf16.msra.mxu0 0
        %375 = vmatprep.subr.bf16.mxu0 0
        %376 = vmatpush2.bf16.msra.mxu0 0
        %377 = vmatprep.mubr.bf16.mxu0 0
        %378 = vmatmul.mubr.bf16.gmra.mxu0 %v289
        %v379 = vpop.f32.mrf.mxu0
        %v380 = vadd.f32 %v271, %v379
        %v381 = vpop.f32.mrf.mxu0
        %v382 = vpop.f32.mrf.mxu0
        %v383 = vadd.f32 %v271, %v382
        %v384 = vpop.f32.mrf.mxu0
        %385 = vmatprep.mubr.bf16.mxu0 0
        %386 = vmatmul.mubr.bf16.gmra.mxu0 %v290
        %v387 = vpop.f32.mrf.mxu0
        %v388 = vadd.f32 %v271, %v387
        %v389 = vpop.f32.mrf.mxu0
        %v390 = vpop.f32.mrf.mxu0
        %v391 = vadd.f32 %v271, %v390
        %v392 = vpop.f32.mrf.mxu0
        %393 = vmatprep.mubr.bf16.mxu0 0
        %394 = vmatmul.mubr.bf16.gmra.mxu0 %v291
        %v395 = vpop.f32.mrf.mxu0
        %v396 = vadd.f32 %v271, %v395
        %v397 = vpop.f32.mrf.mxu0
        %v398 = vpop.f32.mrf.mxu0
        %v399 = vadd.f32 %v271, %v398
        %v400 = vpop.f32.mrf.mxu0
        %401 = vmatprep.mubr.bf16.mxu0 0
        %402 = vmatmul.mubr.bf16.gmra.mxu0 %v292
        %v403 = vpop.f32.mrf.mxu0
        %v404 = vadd.f32 %v271, %v403
        %v405 = vpop.f32.mrf.mxu0
        %v406 = vpop.f32.mrf.mxu0
        %v407 = vadd.f32 %v271, %v406
        %v408 = vpop.f32.mrf.mxu0
        %409 = vdwg.mxu0
        %v410 = vmin.f32 %v380, 0.0
        %v411 = vmin.f32 %v383, 0.0
        %v412 = vmin.f32 %v388, 0.0
        %v413 = vmin.f32 %v391, 0.0
        %v414 = vmin.f32 %v396, 0.0
        %v415 = vmin.f32 %v399, 0.0
        %v416 = vmin.f32 %v404, 0.0
        %v417 = vmin.f32 %v407, 0.0
        %v418 = vmul.f32 %v410, 1.442695
        %v419 = vpow.pop %v418
        %v420 = vmul.f32 %v411, 1.442695
        %v421 = vpow.pop %v420
        %v422 = vmul.f32 %v412, 1.442695
        %v423 = vpow.pop %v422
        %v424 = vmul.f32 %v413, 1.442695
        %v425 = vpow.pop %v424
        %v426 = vmul.f32 %v414, 1.442695
        %v427 = vpow.pop %v426
        %v428 = vmul.f32 %v415, 1.442695
        %v429 = vpow.pop %v428
        %v430 = vmul.f32 %v416, 1.442695
        %v431 = vpow.pop %v430
        %v432 = vmul.f32 %v417, 1.442695
        %v433 = vpow.pop %v432
        %v434 = vsub.f32 %v419, 1.0
        %v435 = vsub.f32 %v421, 1.0
        %v436 = vsub.f32 %v423, 1.0
        %v437 = vsub.f32 %v425, 1.0
        %v438 = vsub.f32 %v427, 1.0
        %v439 = vsub.f32 %v429, 1.0
        %v440 = vsub.f32 %v431, 1.0
        %v441 = vsub.f32 %v433, 1.0
        %v442 = vmul.f32 %v434, 0.01
        %v443 = vmul.f32 %v435, 0.01
        %v444 = vmul.f32 %v436, 0.01
        %v445 = vmul.f32 %v437, 0.01
        %v446 = vmul.f32 %v438, 0.01
        %v447 = vmul.f32 %v439, 0.01
        %v448 = vmul.f32 %v440, 0.01
        %v449 = vmul.f32 %v441, 0.01
        %vm450 = vcmp.gt.f32.partialorder %v380, 0.0
        %vm451 = vcmp.gt.f32.partialorder %v383, 0.0
        %vm452 = vcmp.gt.f32.partialorder %v388, 0.0
        %vm453 = vcmp.gt.f32.partialorder %v391, 0.0
        %vm454 = vcmp.gt.f32.partialorder %v396, 0.0
        %vm455 = vcmp.gt.f32.partialorder %v399, 0.0
        %vm456 = vcmp.gt.f32.partialorder %v404, 0.0
        %vm457 = vcmp.gt.f32.partialorder %v407, 0.0
        %v458 = vsel %vm450, %v380, %v442
        %v459 = vsel %vm451, %v383, %v443
        %v460 = vsel %vm452, %v388, %v444
        %v461 = vsel %vm453, %v391, %v445
        %v462 = vsel %vm454, %v396, %v446
        %v463 = vsel %vm455, %v399, %v447
        %v464 = vsel %vm456, %v404, %v448
        %v465 = vsel %vm457, %v407, %v449
        %v466 = vpack.c.bf16 %v459, %v458
        %v467 = vpack.c.bf16 %v461, %v460
        %v468 = vpack.c.bf16 %v463, %v462
        %v469 = vpack.c.bf16 %v465, %v464
        %v474 = vunpack.c.l.b16 %v466
        %v475 = vunpack.c.h.b16 %v466
        %v476 = vunpack.c.l.b16 %v467
        %v477 = vunpack.c.h.b16 %v467
        %v478 = vunpack.c.l.b16 %v468
        %v479 = vunpack.c.h.b16 %v468
        %v480 = vunpack.c.l.b16 %v469
        %v481 = vunpack.c.h.b16 %v469
        %v482 = vpack.c.b16 %v474, %v474
        %v483 = vpack.c.b16 %v475, %v475
        %v484 = vpack.c.b16 %v476, %v476
        %v485 = vpack.c.b16 %v477, %v477
        %v486 = vpack.c.b16 %v478, %v478
        %v487 = vpack.c.b16 %v479, %v479
        %v488 = vpack.c.b16 %v480, %v480
        %v489 = vpack.c.b16 %v481, %v481
        %498 = vst [vmem:[%s235] sm:$0xf] %v482
        %499 = vst [vmem:[%s235 + $0x4] sm:$0xf] %v483
        %500 = vst [vmem:[%s235 + $0x8] sm:$0xf] %v484
        %501 = vst [vmem:[%s235 + $0xc] sm:$0xf] %v485
        %502 = vst [vmem:[%s235 + $0x10] sm:$0xf] %v486
        %503 = vst [vmem:[%s235 + $0x14] sm:$0xf] %v487
        %504 = vst [vmem:[%s235 + $0x18] sm:$0xf] %v488
        %505 = vst [vmem:[%s235 + $0x1c] sm:$0xf] %v489
        %s506 = sand.u32 %s121, 1
        %s507 = scalar_lea.sflag [#allocation4], %s506
        %s508 = sand.u32 %s121, 1
        %s509 = smul.addr %s508, 32
        %s510 = scalar_lea.vmem [#allocation7], %s509
        // Predicated region
        $region41: #{tpu_custom_call.1} parent=31 // pred_check
          %p511 = pneg %p131
        $region42: #{tpu_custom_call.1} parent=31 // pred_check_branch
          %513 = sbr.rel (%p511) target = $region44
        $region43: #{tpu_custom_call.1} parent=31 // pred_region
          %s514 = smul.u32 8, %s25
          %s516 = ssub.s32 512, 512
          %517 = vsyncadd %s507, %s516
          %s518 = sadd.s32 %s26, %s514
          %s519 = smul.addr %s518, 64
          %s520 = scalar_lea.hbm %s3, %s519
          %s521 = sshll.u32 %s510, 4
          %s522 = int_to_ptr.vmem [resolvable:$true] %s521
          %527 = dma.vmem_to_hbm [thread:$0]  %s522, 512, %s520, %s507, 64, 64, 4
        $region44: #{tpu_custom_call.1} parent=31 // pred_fallthru
          _
      $region32: #{tpu_custom_call.1} parent=5 // pred_fallthru
        _
      %p528 = scmp.le.s32.totalorder 2, %s16
      // Predicated region
      $region45: #{tpu_custom_call.1} parent=5 // pred_check
        %p529 = pneg %p528
      $region46: #{tpu_custom_call.1} parent=5 // pred_check_branch
        %531 = sbr.rel (%p529) target = $region48
      $region47: #{tpu_custom_call.1} parent=5 // pred_region
        %s532 = ssub.s32 %s16, 2
        // Predicated region
        $region49: #{tpu_custom_call.1} parent=47 // pred_check
          %p533 = pneg %p137
        $region50: #{tpu_custom_call.1} parent=47 // pred_check_branch
          %535 = sbr.rel (%p533) target = $region52
        $region51: #{tpu_custom_call.1} parent=47 // pred_region
          %s536 = sand.u32 %s122, 1
          %s537 = scalar_lea.sflag [#allocation4], %s536
          %s538 = sand.u32 %s122, 1
          %s539 = smul.addr %s538, 32
          %s540 = scalar_lea.vmem [#allocation7], %s539
          %541 = dma.done %s537, 512
        $region52: #{tpu_custom_call.1} parent=47 // pred_fallthru
          _
      $region48: #{tpu_custom_call.1} parent=5 // pred_fallthru
        _
    $region6: #{tpu_custom_call.1} parent=1 // loop_footer
      %s20 = sadd.s32 1, %s16
    $region7: #{tpu_custom_call.1} parent=1 // loop_footer_branch
      %15 = sbr.rel target = $region3
    $region8: #{tpu_custom_call.1} parent=1 // loop_exit
      _
    %542 = vsyncpa [#allocation3], 1
    %s543 = scalar_lea.sflag [#allocation3], 1
    %544 = vsyncpa %s543, 1
    %545 = vsyncpa [#allocation6], 1
    %546 = vsyncpa [#allocation4], 1
    %s547 = scalar_lea.sflag [#allocation4], 1
    %548 = vsyncpa %s547, 1

</llo_original>
